<compile_context>
chip_gen: v7x
topology: tpu7x:2x2x1
jax: 0.10.0
libtpu: 0.0.40
codegen_flags: <defaults>
</compile_context>

<pallas_src>
import functools
import math

import jax
import jax.numpy as jnp
from jax import lax
from jax.experimental import pallas as pl
from jax.experimental.pallas import tpu as pltpu


# Distinct stream keys (arbitrary odd 32-bit constants) for the three independent
# random streams, plus mixing constants (murmur3-style finalizer).
_KEY_U1 = 0x85459F85
_KEY_U2 = 0x38FB2B8D
_KEY_DROP = 0x6B79F8A1
_SEED_STRIDE = 0x27D4EB2F   # spreads consecutive seeds far apart in counter space
_GOLDEN = 0x9E3779B9
_MIX1 = 0x85EBCA6B
_MIX2 = 0xC2B2AE35


def _mix32(ctr_u32, key):
    """murmur3-finalizer-style mixer: 32 well-scrambled bits per (counter, key)."""
    x = ctr_u32 * jnp.uint32(_GOLDEN) + jnp.uint32(key)
    x = x ^ (x >> jnp.uint32(16))
    x = x * jnp.uint32(_MIX1)
    x = x ^ (x >> jnp.uint32(13))
    x = x * jnp.uint32(_MIX2)
    x = x ^ (x >> jnp.uint32(16))
    return x


def _bits_to_unit(bits_u32):
    """uint32 bits -> float32 uniform in [0, 1): mantissa trick, no int->float cvt."""
    fbits = (bits_u32 & jnp.uint32(0x007FFFFF)) | jnp.uint32(0x3F800000)
    return lax.bitcast_convert_type(fbits, jnp.float32) - jnp.float32(1.0)


def _noise_kernel(seed_ref, x_ref, o_ref, *, alpha, keep_prob, apply_dropout):
    tr, cols = x_ref.shape
    half = cols // 2

    # Per-block, per-element counters (int32 math; wrapping is fine for hashing).
    seed_off = seed_ref[0] * jnp.int32(_SEED_STRIDE)
    blk = pl.program_id(0)

    # --- Gaussian noise: one Box-Muller pair feeds TWO output elements. -------
    pr = lax.broadcasted_iota(jnp.int32, (tr, half), 0)
    pc = lax.broadcasted_iota(jnp.int32, (tr, half), 1)
    pair_ctr = seed_off + blk * jnp.int32(tr * half) + pr * jnp.int32(half) + pc
    pair_ctr = lax.bitcast_convert_type(pair_ctr, jnp.uint32)

    u1 = jnp.float32(1.0) - _bits_to_unit(_mix32(pair_ctr, _KEY_U1))   # (0, 1]
    u2 = _bits_to_unit(_mix32(pair_ctr, _KEY_U2))                      # [0, 1)
    r = jnp.sqrt(jnp.float32(-2.0) * jnp.log(u1))
    theta = jnp.float32(2.0 * math.pi) * u2
    # Use BOTH Box-Muller outputs: cos branch -> left columns, sin -> right.
    gauss = jnp.concatenate([r * jnp.cos(theta), r * jnp.sin(theta)], axis=-1)

    x = x_ref[...].astype(jnp.float32)

    if apply_dropout:
        # Inverted-dropout rescale folded into the constants (one mul saved).
        y = x * jnp.float32(1.0 / keep_prob) + jnp.float32(alpha / keep_prob) * gauss
        er = lax.broadcasted_iota(jnp.int32, (tr, cols), 0)
        ec = lax.broadcasted_iota(jnp.int32, (tr, cols), 1)
        elem_ctr = seed_off + blk * jnp.int32(tr * cols) + er * jnp.int32(cols) + ec
        drop_bits = _mix32(lax.bitcast_convert_type(elem_ctr, jnp.uint32), _KEY_DROP)
        # Integer-threshold keep mask on the top 31 bits (sign-safe compare).
        thresh = jnp.uint32(min(int(keep_prob * (1 << 31)), (1 << 31) - 1))
        keep = (drop_bits >> jnp.uint32(1)) < thresh
        y = jnp.where(keep, y, jnp.float32(0.0))
    else:
        y = x + jnp.float32(alpha) * gauss

    o_ref[...] = y.astype(o_ref.dtype)


def noise_layer(x: jax.Array,
                *,
                alpha: float = 0.01,
                dropout: float = 0.5,
                training: bool = True,
                seed: int = 0,
                block_bytes: int = 2 << 20) -> jax.Array:
    """Pallas implementation of NoiseLayer.forward(x)."""
    orig_shape = x.shape
    orig_dtype = x.dtype
    total = int(x.size)
    if total == 0:
        return x

    apply_dropout = bool(training) and float(dropout) > 0.0
    if apply_dropout and float(dropout) >= 1.0:
        # F.dropout with p=1 zeroes everything.
        return jnp.zeros_like(x)
    keep_prob = 1.0 - float(dropout) if apply_dropout else 1.0

    # Lane-dense 2D view (last dim a multiple of 128).  Prefer a column count
    # that divides the element count exactly: no wrapper pad / slice, so the
    # kernel reads and writes the original flat buffer directly.
    cols = next((c for c in (1024, 512, 256, 128) if total % c == 0), None)
    flat = x.reshape(-1)
    padded = False
    if cols is None:
        # TODO(synk): mask the tail block in-kernel (scalar-prefetch `total` +
        # masked store) instead of padding when size is not a multiple of 128.
        cols = 1024
        rows = pl.cdiv(total, cols)
        flat = jnp.pad(flat, (0, rows * cols - total))
        padded = True
    else:
        rows = total // cols
    x2 = flat.reshape(rows, cols)

    # Row tile: multiple of the packed sublane count, <= ~block_bytes, and split
    # into >=2 blocks whenever possible so the "parallel" grid axis can shard
    # across both v7x TensorCores.
    itemsize = jnp.dtype(orig_dtype).itemsize
    sub = max(8, 32 // max(1, itemsize))     # 8 (f32) / 16 (bf16) / 32 (int8)
    if rows <= sub:
        tr = rows                            # single block covering full extent
    else:
        max_tr = max(sub, (int(block_bytes) // (cols * itemsize)) // sub * sub)
        tr = max(sub, min(max_tr, (rows // sub) * sub))
        if tr >= rows:                       # would be a 1-block grid: split it
            tr = max(sub, (((rows + 1) // 2 + sub - 1) // sub) * sub)
    grid = (pl.cdiv(rows, tr),)

    kernel = functools.partial(
        _noise_kernel,
        alpha=float(alpha),
        keep_prob=float(keep_prob),
        apply_dropout=apply_dropout,
    )
    seeds = jnp.asarray([seed], dtype=jnp.int32)

    out2 = pl.pallas_call(
        kernel,
        out_shape=jax.ShapeDtypeStruct((rows, cols), orig_dtype),
        grid_spec=pltpu.PrefetchScalarGridSpec(
            num_scalar_prefetch=1,
            grid=grid,
            in_specs=[pl.BlockSpec((tr, cols), lambda i, seed_ref: (i, 0))],
            out_specs=pl.BlockSpec((tr, cols), lambda i, seed_ref: (i, 0)),
        ),
        compiler_params=pltpu.CompilerParams(
            dimension_semantics=("parallel",),
            vmem_limit_bytes=32 << 20,
        ),
    )(seeds, x2)

    out_flat = out2.reshape(-1)
    if padded:
        out_flat = out_flat[:total]
    return out_flat.reshape(orig_shape)


if __name__ == "__main__":
    key = jax.random.PRNGKey(0)
    # Small NCHW input, consistent with how NoiseLayer is used in a conv net.
    x = jax.random.normal(key, (2, 4, 16, 16), dtype=jnp.float32)

    alpha, p = 0.01, 0.5

    # Training mode: gaussian noise + inverted dropout.
    y_train = noise_layer(x, alpha=alpha, dropout=p, training=True, seed=0)
    jax.block_until_ready(y_train)
    assert y_train.shape == x.shape and y_train.dtype == x.dtype
    zero_frac = float(jnp.mean((y_train == 0.0).astype(jnp.float32)))
    assert 0.3 < zero_frac < 0.7, f"unexpected dropout zero fraction {zero_frac}"
    kept = y_train != 0.0
    kept_err = jnp.abs(jnp.where(kept, y_train - x / (1.0 - p), 0.0))
    assert float(jnp.max(kept_err)) < 0.2, float(jnp.max(kept_err))

    # Eval mode: only the gaussian perturbation (F.dropout is a no-op).
    y_eval = noise_layer(x, alpha=alpha, dropout=p, training=False, seed=1)
    jax.block_until_ready(y_eval)
    assert y_eval.shape == x.shape and y_eval.dtype == x.dtype
    diff = y_eval - x
    assert float(jnp.max(jnp.abs(diff))) < 0.1        # noise is O(alpha)
    assert float(jnp.std(diff)) > 1e-4                # noise was actually added

    # Odd-sized input exercises the pad fallback path.
    x_odd = jax.random.normal(jax.random.PRNGKey(1), (3, 5, 7), dtype=jnp.float32)
    y_odd = noise_layer(x_odd, alpha=alpha, dropout=p, training=False, seed=2)
    jax.block_until_ready(y_odd)
    assert y_odd.shape == x_odd.shape and y_odd.dtype == x_odd.dtype
    assert bool(jnp.all(jnp.isfinite(y_odd)))

    print("KERNEL_OK")
</pallas_src>

<mosaic_0001>
module attributes {stable_mosaic.version = 11 : i64} {
  func.func @_noise_kernel(%arg0: i32, %arg1: memref<1xi32, #tpu.memory_space<smem>>, %arg2: memref<2x1024xf32, #tpu.memory_space<vmem>>, %arg3: memref<2x1024xf32, #tpu.memory_space<vmem>>) attributes {dimension_semantics = [#tpu.dimension_semantics<parallel>], iteration_bounds = array<i64: 1>, scalar_prefetch = 1 : i64, scratch_operands = 0 : i64, tpu.core_type = #tpu.core_type<tc>, window_params = [{transform_indices = @transform_0, window_bounds = array<i64: 2, 1024>}, {transform_indices = @transform_1, window_bounds = array<i64: 2, 1024>}]} {
    %c0 = arith.constant 0 : index
    %0 = memref.load %arg1[%c0] : memref<1xi32, #tpu.memory_space<smem>>
    %c668265263_i32 = arith.constant 668265263 : i32
    %1 = arith.muli %0, %c668265263_i32 : i32
    %2 = tpu.iota {dimensions = array<i32: 0>} : vector<2x512xi32>
    %3 = tpu.iota {dimensions = array<i32: 1>} : vector<2x512xi32>
    %c1024_i32 = arith.constant 1024 : i32
    %4 = arith.muli %arg0, %c1024_i32 : i32
    %5 = arith.addi %1, %4 : i32
    %c512_i32 = arith.constant 512 : i32
    %6 = vector.broadcast %c512_i32 : i32 to vector<2x512xi32>
    %7 = arith.muli %2, %6 : vector<2x512xi32>
    %8 = vector.broadcast %5 : i32 to vector<2x512xi32>
    %9 = arith.addi %8, %7 : vector<2x512xi32>
    %10 = arith.addi %9, %3 : vector<2x512xi32>
    %11 = tpu.bitcast %10 : vector<2x512xi32> -> vector<2x512xi32>
    %c-1640531527_i32 = arith.constant -1640531527 : i32
    %12 = vector.broadcast %c-1640531527_i32 : i32 to vector<2x512xi32>
    %13 = arith.muli %11, %12 : vector<2x512xi32>
    %c-2059034747_i32 = arith.constant -2059034747 : i32
    %14 = vector.broadcast %c-2059034747_i32 : i32 to vector<2x512xi32>
    %15 = arith.addi %13, %14 : vector<2x512xi32>
    %c16_i32 = arith.constant 16 : i32
    %16 = vector.broadcast %c16_i32 : i32 to vector<2x512xi32>
    %17 = arith.shrui %15, %16 : vector<2x512xi32>
    %18 = arith.xori %15, %17 : vector<2x512xi32>
    %c-2048144789_i32 = arith.constant -2048144789 : i32
    %19 = vector.broadcast %c-2048144789_i32 : i32 to vector<2x512xi32>
    %20 = arith.muli %18, %19 : vector<2x512xi32>
    %c13_i32 = arith.constant 13 : i32
    %21 = vector.broadcast %c13_i32 : i32 to vector<2x512xi32>
    %22 = arith.shrui %20, %21 : vector<2x512xi32>
    %23 = arith.xori %20, %22 : vector<2x512xi32>
    %c-1028477387_i32 = arith.constant -1028477387 : i32
    %24 = vector.broadcast %c-1028477387_i32 : i32 to vector<2x512xi32>
    %25 = arith.muli %23, %24 : vector<2x512xi32>
    %c16_i32_0 = arith.constant 16 : i32
    %26 = vector.broadcast %c16_i32_0 : i32 to vector<2x512xi32>
    %27 = arith.shrui %25, %26 : vector<2x512xi32>
    %28 = arith.xori %25, %27 : vector<2x512xi32>
    %c8388607_i32 = arith.constant 8388607 : i32
    %29 = vector.broadcast %c8388607_i32 : i32 to vector<2x512xi32>
    %30 = arith.andi %28, %29 : vector<2x512xi32>
    %c1065353216_i32 = arith.constant 1065353216 : i32
    %31 = vector.broadcast %c1065353216_i32 : i32 to vector<2x512xi32>
    %32 = arith.ori %30, %31 : vector<2x512xi32>
    %33 = tpu.bitcast %32 : vector<2x512xi32> -> vector<2x512xf32>
    %cst = arith.constant 1.000000e+00 : f32
    %34 = vector.broadcast %cst : f32 to vector<2x512xf32>
    %35 = arith.subf %33, %34 : vector<2x512xf32>
    %cst_1 = arith.constant 1.000000e+00 : f32
    %36 = vector.broadcast %cst_1 : f32 to vector<2x512xf32>
    %37 = arith.subf %36, %35 : vector<2x512xf32>
    %c-1640531527_i32_2 = arith.constant -1640531527 : i32
    %38 = vector.broadcast %c-1640531527_i32_2 : i32 to vector<2x512xi32>
    %39 = arith.muli %11, %38 : vector<2x512xi32>
    %c955984781_i32 = arith.constant 955984781 : i32
    %40 = vector.broadcast %c955984781_i32 : i32 to vector<2x512xi32>
    %41 = arith.addi %39, %40 : vector<2x512xi32>
    %c16_i32_3 = arith.constant 16 : i32
    %42 = vector.broadcast %c16_i32_3 : i32 to vector<2x512xi32>
    %43 = arith.shrui %41, %42 : vector<2x512xi32>
    %44 = arith.xori %41, %43 : vector<2x512xi32>
    %c-2048144789_i32_4 = arith.constant -2048144789 : i32
    %45 = vector.broadcast %c-2048144789_i32_4 : i32 to vector<2x512xi32>
    %46 = arith.muli %44, %45 : vector<2x512xi32>
    %c13_i32_5 = arith.constant 13 : i32
    %47 = vector.broadcast %c13_i32_5 : i32 to vector<2x512xi32>
    %48 = arith.shrui %46, %47 : vector<2x512xi32>
    %49 = arith.xori %46, %48 : vector<2x512xi32>
    %c-1028477387_i32_6 = arith.constant -1028477387 : i32
    %50 = vector.broadcast %c-1028477387_i32_6 : i32 to vector<2x512xi32>
    %51 = arith.muli %49, %50 : vector<2x512xi32>
    %c16_i32_7 = arith.constant 16 : i32
    %52 = vector.broadcast %c16_i32_7 : i32 to vector<2x512xi32>
    %53 = arith.shrui %51, %52 : vector<2x512xi32>
    %54 = arith.xori %51, %53 : vector<2x512xi32>
    %c8388607_i32_8 = arith.constant 8388607 : i32
    %55 = vector.broadcast %c8388607_i32_8 : i32 to vector<2x512xi32>
    %56 = arith.andi %54, %55 : vector<2x512xi32>
    %c1065353216_i32_9 = arith.constant 1065353216 : i32
    %57 = vector.broadcast %c1065353216_i32_9 : i32 to vector<2x512xi32>
    %58 = arith.ori %56, %57 : vector<2x512xi32>
    %59 = tpu.bitcast %58 : vector<2x512xi32> -> vector<2x512xf32>
    %cst_10 = arith.constant 1.000000e+00 : f32
    %60 = vector.broadcast %cst_10 : f32 to vector<2x512xf32>
    %61 = arith.subf %59, %60 : vector<2x512xf32>
    %62 = math.log %37 : vector<2x512xf32>
    %cst_11 = arith.constant -2.000000e+00 : f32
    %63 = vector.broadcast %cst_11 : f32 to vector<2x512xf32>
    %64 = arith.mulf %63, %62 : vector<2x512xf32>
    %65 = math.sqrt %64 : vector<2x512xf32>
    %cst_12 = arith.constant 6.28318548 : f32
    %66 = vector.broadcast %cst_12 : f32 to vector<2x512xf32>
    %67 = arith.mulf %66, %61 : vector<2x512xf32>
    %68 = math.cos %67 : vector<2x512xf32>
    %69 = arith.mulf %65, %68 : vector<2x512xf32>
    %70 = math.sin %67 : vector<2x512xf32>
    %71 = arith.mulf %65, %70 : vector<2x512xf32>
    %72 = tpu.concatenate %69, %71 in 1 : vector<2x512xf32>, vector<2x512xf32> -> vector<2x1024xf32>
    %c0_13 = arith.constant 0 : index
    %c0_14 = arith.constant 0 : index
    %73 = vector.load %arg2[%c0_13, %c0_14] : memref<2x1024xf32, #tpu.memory_space<vmem>>, vector<2x1024xf32>
    %cst_15 = arith.constant 2.000000e+00 : f32
    %74 = vector.broadcast %cst_15 : f32 to vector<2x1024xf32>
    %75 = arith.mulf %73, %74 : vector<2x1024xf32>
    %cst_16 = arith.constant 2.000000e-02 : f32
    %76 = vector.broadcast %cst_16 : f32 to vector<2x1024xf32>
    %77 = arith.mulf %76, %72 : vector<2x1024xf32>
    %78 = arith.addf %75, %77 : vector<2x1024xf32>
    %79 = tpu.iota {dimensions = array<i32: 0>} : vector<2x1024xi32>
    %80 = tpu.iota {dimensions = array<i32: 1>} : vector<2x1024xi32>
    %c2048_i32 = arith.constant 2048 : i32
    %81 = arith.muli %arg0, %c2048_i32 : i32
    %82 = arith.addi %1, %81 : i32
    %c1024_i32_17 = arith.constant 1024 : i32
    %83 = vector.broadcast %c1024_i32_17 : i32 to vector<2x1024xi32>
    %84 = arith.muli %79, %83 : vector<2x1024xi32>
    %85 = vector.broadcast %82 : i32 to vector<2x1024xi32>
    %86 = arith.addi %85, %84 : vector<2x1024xi32>
    %87 = arith.addi %86, %80 : vector<2x1024xi32>
    %88 = tpu.bitcast %87 : vector<2x1024xi32> -> vector<2x1024xi32>
    %c-1640531527_i32_18 = arith.constant -1640531527 : i32
    %89 = vector.broadcast %c-1640531527_i32_18 : i32 to vector<2x1024xi32>
    %90 = arith.muli %88, %89 : vector<2x1024xi32>
    %c1803155617_i32 = arith.constant 1803155617 : i32
    %91 = vector.broadcast %c1803155617_i32 : i32 to vector<2x1024xi32>
    %92 = arith.addi %90, %91 : vector<2x1024xi32>
    %c16_i32_19 = arith.constant 16 : i32
    %93 = vector.broadcast %c16_i32_19 : i32 to vector<2x1024xi32>
    %94 = arith.shrui %92, %93 : vector<2x1024xi32>
    %95 = arith.xori %92, %94 : vector<2x1024xi32>
    %c-2048144789_i32_20 = arith.constant -2048144789 : i32
    %96 = vector.broadcast %c-2048144789_i32_20 : i32 to vector<2x1024xi32>
    %97 = arith.muli %95, %96 : vector<2x1024xi32>
    %c13_i32_21 = arith.constant 13 : i32
    %98 = vector.broadcast %c13_i32_21 : i32 to vector<2x1024xi32>
    %99 = arith.shrui %97, %98 : vector<2x1024xi32>
    %100 = arith.xori %97, %99 : vector<2x1024xi32>
    %c-1028477387_i32_22 = arith.constant -1028477387 : i32
    %101 = vector.broadcast %c-1028477387_i32_22 : i32 to vector<2x1024xi32>
    %102 = arith.muli %100, %101 : vector<2x1024xi32>
    %c16_i32_23 = arith.constant 16 : i32
    %103 = vector.broadcast %c16_i32_23 : i32 to vector<2x1024xi32>
    %104 = arith.shrui %102, %103 : vector<2x1024xi32>
    %105 = arith.xori %102, %104 : vector<2x1024xi32>
    %c1_i32 = arith.constant 1 : i32
    %106 = vector.broadcast %c1_i32 : i32 to vector<2x1024xi32>
    %107 = arith.shrui %105, %106 : vector<2x1024xi32>
    %c1073741824_i32 = arith.constant 1073741824 : i32
    %108 = vector.broadcast %c1073741824_i32 : i32 to vector<2x1024xi32>
    %109 = arith.cmpi ult, %107, %108 : vector<2x1024xi32>
    %cst_24 = arith.constant 0.000000e+00 : f32
    %110 = vector.broadcast %cst_24 : f32 to vector<2x1024xf32>
    %111 = arith.select %109, %78, %110 : vector<2x1024xi1>, vector<2x1024xf32>
    %c0_25 = arith.constant 0 : index
    %c0_26 = arith.constant 0 : index
    %112 = vector.load %arg3[%c0_25, %c0_26] : memref<2x1024xf32, #tpu.memory_space<vmem>>, vector<2x1024xf32>
    tpu.vector_store %arg3[%c0_25, %c0_26], %111 {strides = array<i32>} : memref<2x1024xf32, #tpu.memory_space<vmem>>, vector<2x1024xf32>,
    return
  }
  func.func @transform_0(%arg0: i32, %arg1: memref<1xi32, #tpu.memory_space<smem>>) -> (i32, i32) {
    %c0_i32 = arith.constant 0 : i32
    %c0_i32_0 = arith.constant 0 : i32
    return %arg0, %c0_i32 : i32, i32
  }
  func.func @transform_1(%arg0: i32, %arg1: memref<1xi32, #tpu.memory_space<smem>>) -> (i32, i32) {
    %c0_i32 = arith.constant 0 : i32
    %c0_i32_0 = arith.constant 0 : i32
    return %arg0, %c0_i32 : i32, i32
  }
}

</mosaic_0001>

<llo_original>
// kernel: tpu_custom_call.1
$region0: #{tpu_custom_call.1}
  #allocation0 [shape = 'u32[]', space=smem, size = 0x4, offset = 0x4, fixed_abs, tag = 'smem constant byte address 0x4 - core index']
  #allocation1 [shape = 'u32[144,128]{1,0:T(1,128)}', space=vmem, size = 0x12000, scoped, tag = 'internal scratch']
  #allocation2 [shape = 's32[1]{0}', space=sflag, size = 0x4, scoped, tag = 'scoped memory for tpu_custom_call.1']
  #allocation3 [shape = 's32[1]{0:T(128)S(6)}', space=smem, size = 0x200, scoped, tag = 'prefetched SMEM operand 0']
  %s0 = inlined_call_operand.<no memory space> [shape: s32[1], index: 0, kind: input, shape index: {}]
  %s1 = inlined_call_operand.hbm [shape: f32[2,1024], index: 1, kind: input, shape index: {}]
  %s2 = inlined_call_operand.hbm [shape: f32[2,1024], index: 2, kind: output, shape index: {}]
  %s3 = sld [smem:[#allocation0]]
  $region18: #{tpu_custom_call.1} parent=0
    _
  %s5 = ssub.s32 1, %s3
  %s6 = scalar_select 0, %s5, %s3
  %7 = sst [smem:[#allocation3]] %s0
  $region1: #{tpu_custom_call.1} parent=0
    #allocation4 [shape = 'u8[8192]{0}', space=vmem, size = 0x2000, scoped, tag = 'input window, operand 1, single buffered']
    #allocation5 [shape = 's32[1]{0}', space=sflag, size = 0x4, scoped, tag = 'scoped memory for tpu_custom_call.1']
    #allocation6 [shape = 's32[1]{0}', space=sflag, size = 0x4, scoped, tag = 'scoped memory for tpu_custom_call.1']
    #allocation7 [shape = 'u8[8192]{0}', space=vmem, size = 0x2000, scoped, tag = 'output window, operand 0, single buffered']
    %8 = vsyncpa [#allocation5], 0
    %9 = vsyncpa [#allocation6], 0
    // Predicated region
    $region2: #{tpu_custom_call.1} parent=1 // pred_check
      _
    $region3: #{tpu_custom_call.1} parent=1 // pred_check_branch
      %11 = sbr.rel (0) target = $region5
    $region4: #{tpu_custom_call.1} parent=1 // pred_region
      %s13 = ssub.s32 256, 256
      %14 = vsyncadd [#allocation5], %s13
      %s16 = sshll.u32 [#allocation4], 4
      %s17 = int_to_ptr.vmem [resolvable:$true] %s16
      %19 = dma.hbm_to_vmem [thread:$0]  %s1, 256, %s17, [#allocation5]
    $region5: #{tpu_custom_call.1} parent=1 // pred_fallthru
      _
    // Predicated region
    $region6: #{tpu_custom_call.1} parent=1 // pred_check
      _
    $region7: #{tpu_custom_call.1} parent=1 // pred_check_branch
      %21 = sbr.rel (0) target = $region9
    $region8: #{tpu_custom_call.1} parent=1 // pred_region
      %22 = dma.done [#allocation5], 256
    $region9: #{tpu_custom_call.1} parent=1 // pred_fallthru
      _
    %s23 = sld [smem:[#allocation3]]
    %s24 = smul.u32 %s23, 668265263
    %v25 = vlaneseq
    %v26 = vshrl.u32 %v25, 7
    %v27 = vlaneseq
    %v28 = vand.u32 %v27, 127
    %v29 = vadd.s32 %v28, 128
    %v30 = vadd.s32 %v28, 256
    %v31 = vadd.s32 %v28, 384
    %s32 = smul.u32 0, 1024
    %s33 = sadd.s32 %s24, %s32
    %v34 = vmul.u32 %v26, 512
    %v35 = vstv %s33
    %v36 = vadd.s32 %v35, %v34
    %v37 = vadd.s32 %v36, %v28
    %v38 = vadd.s32 %v36, %v29
    %v39 = vadd.s32 %v36, %v30
    %v40 = vadd.s32 %v36, %v31
    %v41 = vmul.u32 %v37, 2654435769
    %v42 = vmul.u32 %v38, 2654435769
    %v43 = vmul.u32 %v39, 2654435769
    %v44 = vmul.u32 %v40, 2654435769
    %v45 = vadd.s32 %v41, 2235932549
    %v46 = vadd.s32 %v42, 2235932549
    %v47 = vadd.s32 %v43, 2235932549
    %v48 = vadd.s32 %v44, 2235932549
    %v49 = vshrl.u32 %v45, 16
    %v50 = vshrl.u32 %v46, 16
    %v51 = vshrl.u32 %v47, 16
    %v52 = vshrl.u32 %v48, 16
    %v53 = vxor.u32 %v45, %v49
    %v54 = vxor.u32 %v46, %v50
    %v55 = vxor.u32 %v47, %v51
    %v56 = vxor.u32 %v48, %v52
    %v57 = vmul.u32 %v53, 2246822507
    %v58 = vmul.u32 %v54, 2246822507
    %v59 = vmul.u32 %v55, 2246822507
    %v60 = vmul.u32 %v56, 2246822507
    %v61 = vshrl.u32 %v57, 13
    %v62 = vshrl.u32 %v58, 13
    %v63 = vshrl.u32 %v59, 13
    %v64 = vshrl.u32 %v60, 13
    %v65 = vxor.u32 %v57, %v61
    %v66 = vxor.u32 %v58, %v62
    %v67 = vxor.u32 %v59, %v63
    %v68 = vxor.u32 %v60, %v64
    %v69 = vmul.u32 %v65, 3266489909
    %v70 = vmul.u32 %v66, 3266489909
    %v71 = vmul.u32 %v67, 3266489909
    %v72 = vmul.u32 %v68, 3266489909
    %v73 = vshrl.u32 %v69, 16
    %v74 = vshrl.u32 %v70, 16
    %v75 = vshrl.u32 %v71, 16
    %v76 = vshrl.u32 %v72, 16
    %v77 = vxor.u32 %v69, %v73
    %v78 = vxor.u32 %v70, %v74
    %v79 = vxor.u32 %v71, %v75
    %v80 = vxor.u32 %v72, %v76
    %v81 = vand.u32 %v77, 8388607
    %v82 = vand.u32 %v78, 8388607
    %v83 = vand.u32 %v79, 8388607
    %v84 = vand.u32 %v80, 8388607
    %v85 = vor.u32 %v81, 1065353216
    %v86 = vor.u32 %v82, 1065353216
    %v87 = vor.u32 %v83, 1065353216
    %v88 = vor.u32 %v84, 1065353216
    %v93 = vsub.f32 %v85, 1.0
    %v94 = vsub.f32 %v86, 1.0
    %v95 = vsub.f32 %v87, 1.0
    %v96 = vsub.f32 %v88, 1.0
    %v97 = vsub.f32 1.0, %v93
    %v98 = vsub.f32 1.0, %v94
    %v99 = vsub.f32 1.0, %v95
    %v100 = vsub.f32 1.0, %v96
    %v101 = vadd.s32 %v41, 955984781
    %v102 = vadd.s32 %v42, 955984781
    %v103 = vadd.s32 %v43, 955984781
    %v104 = vadd.s32 %v44, 955984781
    %v105 = vshrl.u32 %v101, 16
    %v106 = vshrl.u32 %v102, 16
    %v107 = vshrl.u32 %v103, 16
    %v108 = vshrl.u32 %v104, 16
    %v109 = vxor.u32 %v101, %v105
    %v110 = vxor.u32 %v102, %v106
    %v111 = vxor.u32 %v103, %v107
    %v112 = vxor.u32 %v104, %v108
    %v113 = vmul.u32 %v109, 2246822507
    %v114 = vmul.u32 %v110, 2246822507
    %v115 = vmul.u32 %v111, 2246822507
    %v116 = vmul.u32 %v112, 2246822507
    %v117 = vshrl.u32 %v113, 13
    %v118 = vshrl.u32 %v114, 13
    %v119 = vshrl.u32 %v115, 13
    %v120 = vshrl.u32 %v116, 13
    %v121 = vxor.u32 %v113, %v117
    %v122 = vxor.u32 %v114, %v118
    %v123 = vxor.u32 %v115, %v119
    %v124 = vxor.u32 %v116, %v120
    %v125 = vmul.u32 %v121, 3266489909
    %v126 = vmul.u32 %v122, 3266489909
    %v127 = vmul.u32 %v123, 3266489909
    %v128 = vmul.u32 %v124, 3266489909
    %v129 = vshrl.u32 %v125, 16
    %v130 = vshrl.u32 %v126, 16
    %v131 = vshrl.u32 %v127, 16
    %v132 = vshrl.u32 %v128, 16
    %v133 = vxor.u32 %v125, %v129
    %v134 = vxor.u32 %v126, %v130
    %v135 = vxor.u32 %v127, %v131
    %v136 = vxor.u32 %v128, %v132
    %v137 = vand.u32 %v133, 8388607
    %v138 = vand.u32 %v134, 8388607
    %v139 = vand.u32 %v135, 8388607
    %v140 = vand.u32 %v136, 8388607
    %v141 = vor.u32 %v137, 1065353216
    %v142 = vor.u32 %v138, 1065353216
    %v143 = vor.u32 %v139, 1065353216
    %v144 = vor.u32 %v140, 1065353216
    %v149 = vsub.f32 %v141, 1.0
    %v150 = vsub.f32 %v142, 1.0
    %v151 = vsub.f32 %v143, 1.0
    %v152 = vsub.f32 %v144, 1.0
    %v153 = vlog2.pop %v97
    %v154 = vmul.f32 %v153, 0.6931472
    %v155 = vlog2.pop %v98
    %v156 = vmul.f32 %v155, 0.6931472
    %v157 = vlog2.pop %v99
    %v158 = vmul.f32 %v157, 0.6931472
    %v159 = vlog2.pop %v100
    %v160 = vmul.f32 %v159, 0.6931472
    %v161 = vmul.f32 %v154, -2.0
    %v162 = vmul.f32 %v156, -2.0
    %v163 = vmul.f32 %v158, -2.0
    %v164 = vmul.f32 %v160, -2.0
    %v165 = vrsqrt.pop %v161
    %v166 = vmul.f32 %v161, %v165
    %vm167 = vcmp.eq.f32.partialorder %v161, inf
    %v168 = vsel %vm167, %v161, %v166
    %vm169 = vcmp.eq.f32.partialorder %v161, 0.0
    %v170 = vand.u32 %v161, 2147483648
    %v171 = vsel %vm169, %v170, %v168
    %v172 = vrsqrt.pop %v162
    %v173 = vmul.f32 %v162, %v172
    %vm174 = vcmp.eq.f32.partialorder %v162, inf
    %v175 = vsel %vm174, %v162, %v173
    %vm176 = vcmp.eq.f32.partialorder %v162, 0.0
    %v177 = vand.u32 %v162, 2147483648
    %v178 = vsel %vm176, %v177, %v175
    %v179 = vrsqrt.pop %v163
    %v180 = vmul.f32 %v163, %v179
    %vm181 = vcmp.eq.f32.partialorder %v163, inf
    %v182 = vsel %vm181, %v163, %v180
    %vm183 = vcmp.eq.f32.partialorder %v163, 0.0
    %v184 = vand.u32 %v163, 2147483648
    %v185 = vsel %vm183, %v184, %v182
    %v186 = vrsqrt.pop %v164
    %v187 = vmul.f32 %v164, %v186
    %vm188 = vcmp.eq.f32.partialorder %v164, inf
    %v189 = vsel %vm188, %v164, %v187
    %vm190 = vcmp.eq.f32.partialorder %v164, 0.0
    %v191 = vand.u32 %v164, 2147483648
    %v192 = vsel %vm190, %v191, %v189
    %v193 = vmul.f32 %v149, 6.2831855
    %v194 = vmul.f32 %v150, 6.2831855
    %v195 = vmul.f32 %v151, 6.2831855
    %v196 = vmul.f32 %v152, 6.2831855
    %v197 = vand.u32 2147483647, %v193
    %vm198 = vcmp.le.f32.partialorder %v197, 0.7853982
    %vm199 = vcmp.lt.s32.totalorder %v193, 0
    %v200 = vand.u32 %v193, 2139095040
    %v201 = vshrl.u32 %v200, 23
    %v202 = vsub.s32 %v201, 127
    %v203 = vand.u32 2147483647, %v193
    %v204 = vand.u32 %v203, 8388607
    %v205 = vor.u32 %v204, 8388608
    %v206 = vsub.s32 0, %v205
    %v207 = vadd.s32 %v202, 1
    %vm208 = vcmp.gt.s32.totalorder %v207, 0
    %v209 = vsel %vm208, %v207, 0
    %v210 = vshrl.u32 %v209, 5
    %v211 = vand.u32 %v209, 31
    %v212 = vsub.s32 32, %v211
    %v213 = vshrl.u32 683565275, %v212
    %v214 = vshll.u32 683565275, %v211
    %v215 = vshrl.u32 2475754826, %v212
    %v216 = vor.u32 %v214, %v215
    %v217 = vshll.u32 2475754826, %v211
    %v218 = vshrl.u32 2131351028, %v212
    %v219 = vor.u32 %v217, %v218
    %v220 = vshll.u32 2131351028, %v211
    %v221 = vshrl.u32 2102212464, %v212
    %v222 = vor.u32 %v220, %v221
    %v223 = vshll.u32 2102212464, %v211
    %v224 = vshrl.u32 920167782, %v212
    %v225 = vor.u32 %v223, %v224
    %v226 = vshll.u32 920167782, %v211
    %v227 = vshrl.u32 1326507024, %v212
    %v228 = vor.u32 %v226, %v227
    %vm229 = vcmp.lt.s32.totalorder %v210, 1
    %vm230 = vcmp.lt.s32.totalorder %v210, 2
    %vm231 = vcmp.lt.s32.totalorder %v210, 3
    %vm232 = vcmp.lt.s32.totalorder %v210, 4
    %v233 = vsel %vm229, %v213, %v216
    %v234 = vsel %vm232, %v222, 2102212464
    %v235 = vsel %vm231, %v219, %v234
    %v236 = vsel %vm230, %v233, %v235
    %v237 = vsel %vm229, %v216, %v219
    %v238 = vsel %vm232, %v225, 920167782
    %v239 = vsel %vm231, %v222, %v238
    %v240 = vsel %vm230, %v237, %v239
    %v241 = vsel %vm229, %v219, %v222
    %v242 = vsel %vm232, %v228, 1326507024
    %v243 = vsel %vm231, %v225, %v242
    %v244 = vsel %vm230, %v241, %v243
    %v245 = vshll.u32 %v205, 8
    %v246 = vmul.u32.u64.compose %v245, %v244
    %v247 = vextract.low.u32 %v246
    %v248 = vextract.high.u32 %v246
    %v249 = vmul.u32.u64.compose %v245, %v240
    %v250 = vextract.low.u32 %v249
    %v251 = vextract.high.u32 %v249
    %v252 = vmul.u32 %v245, %v236
    %v253 = vadd.s32 %v248, %v250
    %vm254 = vc.u32 %v248, %v250
    %v255 = vadd.s32 %v251, 1
    %v256 = vsel %vm254, %v255, %v251
    %v257 = vadd.s32 %v252, %v256
    %v258 = vadd.s32 %v257, 536870912
    %v259 = vshrl.u32 %v258, 30
    %v260 = vshll.u32 %v259, 30
    %v261 = vsub.s32 %v257, %v260
    %vm262 = vcmp.lt.s32.totalorder %v261, 0
    %v263 = vsub.s32 0, %v261
    %v264 = vsel %vm262, %v263, %v261
    %v265 = vclz %v264
    %v266 = vsub.s32 %v265, 2
    %vm267 = vcmp.gt.s32.totalorder 0, %v266
    %v268 = vsel %vm267, 0, %v266
    %v269 = vsub.s32 32, %v268
    %v270 = vshll.u32 %v261, %v268
    %v271 = vshrl.u32 %v253, %v269
    %v272 = vor.u32 %v270, %v271
    %v273 = vsub.s32 4294967266, %v268
    %v274 = vadd.s32 %v273, 127
    %v275 = vshll.u32 %v274, 23
    %v276 = vor.u32 4788187, %v275
    %v277 = vand.u32 2147483647, %v276
    %v279 = vcvt.s32.f32 %v272
    %v280 = vmul.f32 %v279, %v277
    %v281 = vxor.u32 %v280, 2147483648
    %v282 = vsel %vm199, %v281, %v280
    %v283 = vsub.s32 4, %v259
    %v284 = vsel %vm199, %v283, %v259
    %v285 = vsel %vm198, %v193, %v282
    %v286 = vsel %vm198, 0, %v284
    %v287 = vcosq.f32.pop %v285
    %v288 = vsinq.f32.pop %v285
    %vm289 = vweird.f32 %v193
    %v290 = vand.u32 %v286, 3
    %vm291 = vcmp.lt.s32.totalorder %v290, 2
    %vm292 = vcmp.eq.s32.totalorder %v290, 0
    %v293 = vxor.u32 %v288, 2147483648
    %v294 = vsel %vm292, %v287, %v293
    %vm295 = vcmp.eq.s32.totalorder %v290, 2
    %v296 = vxor.u32 %v287, 2147483648
    %v297 = vsel %vm295, %v296, %v288
    %v298 = vsel %vm291, %v294, %v297
    %v299 = vsel %vm289, nan, %v298
    %v300 = vand.u32 2147483647, %v194
    %vm301 = vcmp.le.f32.partialorder %v300, 0.7853982
    %vm302 = vcmp.lt.s32.totalorder %v194, 0
    %v303 = vand.u32 %v194, 2139095040
    %v304 = vshrl.u32 %v303, 23
    %v305 = vsub.s32 %v304, 127
    %v306 = vand.u32 2147483647, %v194
    %v307 = vand.u32 %v306, 8388607
    %v308 = vor.u32 %v307, 8388608
    %v309 = vsub.s32 0, %v308
    %v310 = vadd.s32 %v305, 1
    %vm311 = vcmp.gt.s32.totalorder %v310, 0
    %v312 = vsel %vm311, %v310, 0
    %v313 = vshrl.u32 %v312, 5
    %v314 = vand.u32 %v312, 31
    %v315 = vsub.s32 32, %v314
    %v316 = vshrl.u32 683565275, %v315
    %v317 = vshll.u32 683565275, %v314
    %v318 = vshrl.u32 2475754826, %v315
    %v319 = vor.u32 %v317, %v318
    %v320 = vshll.u32 2475754826, %v314
    %v321 = vshrl.u32 2131351028, %v315
    %v322 = vor.u32 %v320, %v321
    %v323 = vshll.u32 2131351028, %v314
    %v324 = vshrl.u32 2102212464, %v315
    %v325 = vor.u32 %v323, %v324
    %v326 = vshll.u32 2102212464, %v314
    %v327 = vshrl.u32 920167782, %v315
    %v328 = vor.u32 %v326, %v327
    %v329 = vshll.u32 920167782, %v314
    %v330 = vshrl.u32 1326507024, %v315
    %v331 = vor.u32 %v329, %v330
    %vm332 = vcmp.lt.s32.totalorder %v313, 1
    %vm333 = vcmp.lt.s32.totalorder %v313, 2
    %vm334 = vcmp.lt.s32.totalorder %v313, 3
    %vm335 = vcmp.lt.s32.totalorder %v313, 4
    %v336 = vsel %vm332, %v316, %v319
    %v337 = vsel %vm335, %v325, 2102212464
    %v338 = vsel %vm334, %v322, %v337
    %v339 = vsel %vm333, %v336, %v338
    %v340 = vsel %vm332, %v319, %v322
    %v341 = vsel %vm335, %v328, 920167782
    %v342 = vsel %vm334, %v325, %v341
    %v343 = vsel %vm333, %v340, %v342
    %v344 = vsel %vm332, %v322, %v325
    %v345 = vsel %vm335, %v331, 1326507024
    %v346 = vsel %vm334, %v328, %v345
    %v347 = vsel %vm333, %v344, %v346
    %v348 = vshll.u32 %v308, 8
    %v349 = vmul.u32.u64.compose %v348, %v347
    %v350 = vextract.low.u32 %v349
    %v351 = vextract.high.u32 %v349
    %v352 = vmul.u32.u64.compose %v348, %v343
    %v353 = vextract.low.u32 %v352
    %v354 = vextract.high.u32 %v352
    %v355 = vmul.u32 %v348, %v339
    %v356 = vadd.s32 %v351, %v353
    %vm357 = vc.u32 %v351, %v353
    %v358 = vadd.s32 %v354, 1
    %v359 = vsel %vm357, %v358, %v354
    %v360 = vadd.s32 %v355, %v359
    %v361 = vadd.s32 %v360, 536870912
    %v362 = vshrl.u32 %v361, 30
    %v363 = vshll.u32 %v362, 30
    %v364 = vsub.s32 %v360, %v363
    %vm365 = vcmp.lt.s32.totalorder %v364, 0
    %v366 = vsub.s32 0, %v364
    %v367 = vsel %vm365, %v366, %v364
    %v368 = vclz %v367
    %v369 = vsub.s32 %v368, 2
    %vm370 = vcmp.gt.s32.totalorder 0, %v369
    %v371 = vsel %vm370, 0, %v369
    %v372 = vsub.s32 32, %v371
    %v373 = vshll.u32 %v364, %v371
    %v374 = vshrl.u32 %v356, %v372
    %v375 = vor.u32 %v373, %v374
    %v376 = vsub.s32 4294967266, %v371
    %v377 = vadd.s32 %v376, 127
    %v378 = vshll.u32 %v377, 23
    %v379 = vor.u32 4788187, %v378
    %v380 = vand.u32 2147483647, %v379
    %v382 = vcvt.s32.f32 %v375
    %v383 = vmul.f32 %v382, %v380
    %v384 = vxor.u32 %v383, 2147483648
    %v385 = vsel %vm302, %v384, %v383
    %v386 = vsub.s32 4, %v362
    %v387 = vsel %vm302, %v386, %v362
    %v388 = vsel %vm301, %v194, %v385
    %v389 = vsel %vm301, 0, %v387
    %v390 = vcosq.f32.pop %v388
    %v391 = vsinq.f32.pop %v388
    %vm392 = vweird.f32 %v194
    %v393 = vand.u32 %v389, 3
    %vm394 = vcmp.lt.s32.totalorder %v393, 2
    %vm395 = vcmp.eq.s32.totalorder %v393, 0
    %v396 = vxor.u32 %v391, 2147483648
    %v397 = vsel %vm395, %v390, %v396
    %vm398 = vcmp.eq.s32.totalorder %v393, 2
    %v399 = vxor.u32 %v390, 2147483648
    %v400 = vsel %vm398, %v399, %v391
    %v401 = vsel %vm394, %v397, %v400
    %v402 = vsel %vm392, nan, %v401
    %v403 = vand.u32 2147483647, %v195
    %vm404 = vcmp.le.f32.partialorder %v403, 0.7853982
    %vm405 = vcmp.lt.s32.totalorder %v195, 0
    %v406 = vand.u32 %v195, 2139095040
    %v407 = vshrl.u32 %v406, 23
    %v408 = vsub.s32 %v407, 127
    %v409 = vand.u32 2147483647, %v195
    %v410 = vand.u32 %v409, 8388607
    %v411 = vor.u32 %v410, 8388608
    %v412 = vsub.s32 0, %v411
    %v413 = vadd.s32 %v408, 1
    %vm414 = vcmp.gt.s32.totalorder %v413, 0
    %v415 = vsel %vm414, %v413, 0
    %v416 = vshrl.u32 %v415, 5
    %v417 = vand.u32 %v415, 31
    %v418 = vsub.s32 32, %v417
    %v419 = vshrl.u32 683565275, %v418
    %v420 = vshll.u32 683565275, %v417
    %v421 = vshrl.u32 2475754826, %v418
    %v422 = vor.u32 %v420, %v421
    %v423 = vshll.u32 2475754826, %v417
    %v424 = vshrl.u32 2131351028, %v418
    %v425 = vor.u32 %v423, %v424
    %v426 = vshll.u32 2131351028, %v417
    %v427 = vshrl.u32 2102212464, %v418
    %v428 = vor.u32 %v426, %v427
    %v429 = vshll.u32 2102212464, %v417
    %v430 = vshrl.u32 920167782, %v418
    %v431 = vor.u32 %v429, %v430
    %v432 = vshll.u32 920167782, %v417
    %v433 = vshrl.u32 1326507024, %v418
    %v434 = vor.u32 %v432, %v433
    %vm435 = vcmp.lt.s32.totalorder %v416, 1
    %vm436 = vcmp.lt.s32.totalorder %v416, 2
    %vm437 = vcmp.lt.s32.totalorder %v416, 3
    %vm438 = vcmp.lt.s32.totalorder %v416, 4
    %v439 = vsel %vm435, %v419, %v422
    %v440 = vsel %vm438, %v428, 2102212464
    %v441 = vsel %vm437, %v425, %v440
    %v442 = vsel %vm436, %v439, %v441
    %v443 = vsel %vm435, %v422, %v425
    %v444 = vsel %vm438, %v431, 920167782
    %v445 = vsel %vm437, %v428, %v444
    %v446 = vsel %vm436, %v443, %v445
    %v447 = vsel %vm435, %v425, %v428
    %v448 = vsel %vm438, %v434, 1326507024
    %v449 = vsel %vm437, %v431, %v448
    %v450 = vsel %vm436, %v447, %v449
    %v451 = vshll.u32 %v411, 8
    %v452 = vmul.u32.u64.compose %v451, %v450
    %v453 = vextract.low.u32 %v452
    %v454 = vextract.high.u32 %v452
    %v455 = vmul.u32.u64.compose %v451, %v446
    %v456 = vextract.low.u32 %v455
    %v457 = vextract.high.u32 %v455
    %v458 = vmul.u32 %v451, %v442
    %v459 = vadd.s32 %v454, %v456
    %vm460 = vc.u32 %v454, %v456
    %v461 = vadd.s32 %v457, 1
    %v462 = vsel %vm460, %v461, %v457
    %v463 = vadd.s32 %v458, %v462
    %v464 = vadd.s32 %v463, 536870912
    %v465 = vshrl.u32 %v464, 30
    %v466 = vshll.u32 %v465, 30
    %v467 = vsub.s32 %v463, %v466
    %vm468 = vcmp.lt.s32.totalorder %v467, 0
    %v469 = vsub.s32 0, %v467
    %v470 = vsel %vm468, %v469, %v467
    %v471 = vclz %v470
    %v472 = vsub.s32 %v471, 2
    %vm473 = vcmp.gt.s32.totalorder 0, %v472
    %v474 = vsel %vm473, 0, %v472
    %v475 = vsub.s32 32, %v474
    %v476 = vshll.u32 %v467, %v474
    %v477 = vshrl.u32 %v459, %v475
    %v478 = vor.u32 %v476, %v477
    %v479 = vsub.s32 4294967266, %v474
    %v480 = vadd.s32 %v479, 127
    %v481 = vshll.u32 %v480, 23
    %v482 = vor.u32 4788187, %v481
    %v483 = vand.u32 2147483647, %v482
    %v485 = vcvt.s32.f32 %v478
    %v486 = vmul.f32 %v485, %v483
    %v487 = vxor.u32 %v486, 2147483648
    %v488 = vsel %vm405, %v487, %v486
    %v489 = vsub.s32 4, %v465
    %v490 = vsel %vm405, %v489, %v465
    %v491 = vsel %vm404, %v195, %v488
    %v492 = vsel %vm404, 0, %v490
    %v493 = vcosq.f32.pop %v491
    %v494 = vsinq.f32.pop %v491
    %vm495 = vweird.f32 %v195
    %v496 = vand.u32 %v492, 3
    %vm497 = vcmp.lt.s32.totalorder %v496, 2
    %vm498 = vcmp.eq.s32.totalorder %v496, 0
    %v499 = vxor.u32 %v494, 2147483648
    %v500 = vsel %vm498, %v493, %v499
    %vm501 = vcmp.eq.s32.totalorder %v496, 2
    %v502 = vxor.u32 %v493, 2147483648
    %v503 = vsel %vm501, %v502, %v494
    %v504 = vsel %vm497, %v500, %v503
    %v505 = vsel %vm495, nan, %v504
    %v506 = vand.u32 2147483647, %v196
    %vm507 = vcmp.le.f32.partialorder %v506, 0.7853982
    %vm508 = vcmp.lt.s32.totalorder %v196, 0
    %v509 = vand.u32 %v196, 2139095040
    %v510 = vshrl.u32 %v509, 23
    %v511 = vsub.s32 %v510, 127
    %v512 = vand.u32 2147483647, %v196
    %v513 = vand.u32 %v512, 8388607
    %v514 = vor.u32 %v513, 8388608
    %v515 = vsub.s32 0, %v514
    %v516 = vadd.s32 %v511, 1
    %vm517 = vcmp.gt.s32.totalorder %v516, 0
    %v518 = vsel %vm517, %v516, 0
    %v519 = vshrl.u32 %v518, 5
    %v520 = vand.u32 %v518, 31
    %v521 = vsub.s32 32, %v520
    %v522 = vshrl.u32 683565275, %v521
    %v523 = vshll.u32 683565275, %v520
    %v524 = vshrl.u32 2475754826, %v521
    %v525 = vor.u32 %v523, %v524
    %v526 = vshll.u32 2475754826, %v520
    %v527 = vshrl.u32 2131351028, %v521
    %v528 = vor.u32 %v526, %v527
    %v529 = vshll.u32 2131351028, %v520
    %v530 = vshrl.u32 2102212464, %v521
    %v531 = vor.u32 %v529, %v530
    %v532 = vshll.u32 2102212464, %v520
    %v533 = vshrl.u32 920167782, %v521
    %v534 = vor.u32 %v532, %v533
    %v535 = vshll.u32 920167782, %v520
    %v536 = vshrl.u32 1326507024, %v521
    %v537 = vor.u32 %v535, %v536
    %vm538 = vcmp.lt.s32.totalorder %v519, 1
    %vm539 = vcmp.lt.s32.totalorder %v519, 2
    %vm540 = vcmp.lt.s32.totalorder %v519, 3
    %vm541 = vcmp.lt.s32.totalorder %v519, 4
    %v542 = vsel %vm538, %v522, %v525
    %v543 = vsel %vm541, %v531, 2102212464
    %v544 = vsel %vm540, %v528, %v543
    %v545 = vsel %vm539, %v542, %v544
    %v546 = vsel %vm538, %v525, %v528
    %v547 = vsel %vm541, %v534, 920167782
    %v548 = vsel %vm540, %v531, %v547
    %v549 = vsel %vm539, %v546, %v548
    %v550 = vsel %vm538, %v528, %v531
    %v551 = vsel %vm541, %v537, 1326507024
    %v552 = vsel %vm540, %v534, %v551
    %v553 = vsel %vm539, %v550, %v552
    %v554 = vshll.u32 %v514, 8
    %v555 = vmul.u32.u64.compose %v554, %v553
    %v556 = vextract.low.u32 %v555
    %v557 = vextract.high.u32 %v555
    %v558 = vmul.u32.u64.compose %v554, %v549
    %v559 = vextract.low.u32 %v558
    %v560 = vextract.high.u32 %v558
    %v561 = vmul.u32 %v554, %v545
    %v562 = vadd.s32 %v557, %v559
    %vm563 = vc.u32 %v557, %v559
    %v564 = vadd.s32 %v560, 1
    %v565 = vsel %vm563, %v564, %v560
    %v566 = vadd.s32 %v561, %v565
    %v567 = vadd.s32 %v566, 536870912
    %v568 = vshrl.u32 %v567, 30
    %v569 = vshll.u32 %v568, 30
    %v570 = vsub.s32 %v566, %v569
    %vm571 = vcmp.lt.s32.totalorder %v570, 0
    %v572 = vsub.s32 0, %v570
    %v573 = vsel %vm571, %v572, %v570
    %v574 = vclz %v573
    %v575 = vsub.s32 %v574, 2
    %vm576 = vcmp.gt.s32.totalorder 0, %v575
    %v577 = vsel %vm576, 0, %v575
    %v578 = vsub.s32 32, %v577
    %v579 = vshll.u32 %v570, %v577
    %v580 = vshrl.u32 %v562, %v578
    %v581 = vor.u32 %v579, %v580
    %v582 = vsub.s32 4294967266, %v577
    %v583 = vadd.s32 %v582, 127
    %v584 = vshll.u32 %v583, 23
    %v585 = vor.u32 4788187, %v584
    %v586 = vand.u32 2147483647, %v585
    %v588 = vcvt.s32.f32 %v581
    %v589 = vmul.f32 %v588, %v586
    %v590 = vxor.u32 %v589, 2147483648
    %v591 = vsel %vm508, %v590, %v589
    %v592 = vsub.s32 4, %v568
    %v593 = vsel %vm508, %v592, %v568
    %v594 = vsel %vm507, %v196, %v591
    %v595 = vsel %vm507, 0, %v593
    %v596 = vcosq.f32.pop %v594
    %v597 = vsinq.f32.pop %v594
    %vm598 = vweird.f32 %v196
    %v599 = vand.u32 %v595, 3
    %vm600 = vcmp.lt.s32.totalorder %v599, 2
    %vm601 = vcmp.eq.s32.totalorder %v599, 0
    %v602 = vxor.u32 %v597, 2147483648
    %v603 = vsel %vm601, %v596, %v602
    %vm604 = vcmp.eq.s32.totalorder %v599, 2
    %v605 = vxor.u32 %v596, 2147483648
    %v606 = vsel %vm604, %v605, %v597
    %v607 = vsel %vm600, %v603, %v606
    %v608 = vsel %vm598, nan, %v607
    %v609 = vmul.f32 %v171, %v299
    %v610 = vmul.f32 %v178, %v402
    %v611 = vmul.f32 %v185, %v505
    %v612 = vmul.f32 %v192, %v608
    %v613 = vand.u32 2147483647, %v193
    %vm614 = vcmp.le.f32.partialorder %v613, 0.7853982
    %vm615 = vcmp.lt.s32.totalorder %v193, 0
    %v616 = vand.u32 %v193, 2139095040
    %v617 = vshrl.u32 %v616, 23
    %v618 = vsub.s32 %v617, 127
    %v619 = vand.u32 2147483647, %v193
    %v620 = vand.u32 %v619, 8388607
    %v621 = vor.u32 %v620, 8388608
    %v622 = vsub.s32 0, %v621
    %v623 = vadd.s32 %v618, 1
    %vm624 = vcmp.gt.s32.totalorder %v623, 0
    %v625 = vsel %vm624, %v623, 0
    %v626 = vshrl.u32 %v625, 5
    %v627 = vand.u32 %v625, 31
    %v628 = vsub.s32 32, %v627
    %v629 = vshrl.u32 683565275, %v628
    %v630 = vshll.u32 683565275, %v627
    %v631 = vshrl.u32 2475754826, %v628
    %v632 = vor.u32 %v630, %v631
    %v633 = vshll.u32 2475754826, %v627
    %v634 = vshrl.u32 2131351028, %v628
    %v635 = vor.u32 %v633, %v634
    %v636 = vshll.u32 2131351028, %v627
    %v637 = vshrl.u32 2102212464, %v628
    %v638 = vor.u32 %v636, %v637
    %v639 = vshll.u32 2102212464, %v627
    %v640 = vshrl.u32 920167782, %v628
    %v641 = vor.u32 %v639, %v640
    %v642 = vshll.u32 920167782, %v627
    %v643 = vshrl.u32 1326507024, %v628
    %v644 = vor.u32 %v642, %v643
    %vm645 = vcmp.lt.s32.totalorder %v626, 1
    %vm646 = vcmp.lt.s32.totalorder %v626, 2
    %vm647 = vcmp.lt.s32.totalorder %v626, 3
    %vm648 = vcmp.lt.s32.totalorder %v626, 4
    %v649 = vsel %vm645, %v629, %v632
    %v650 = vsel %vm648, %v638, 2102212464
    %v651 = vsel %vm647, %v635, %v650
    %v652 = vsel %vm646, %v649, %v651
    %v653 = vsel %vm645, %v632, %v635
    %v654 = vsel %vm648, %v641, 920167782
    %v655 = vsel %vm647, %v638, %v654
    %v656 = vsel %vm646, %v653, %v655
    %v657 = vsel %vm645, %v635, %v638
    %v658 = vsel %vm648, %v644, 1326507024
    %v659 = vsel %vm647, %v641, %v658
    %v660 = vsel %vm646, %v657, %v659
    %v661 = vshll.u32 %v621, 8
    %v662 = vmul.u32.u64.compose %v661, %v660
    %v663 = vextract.low.u32 %v662
    %v664 = vextract.high.u32 %v662
    %v665 = vmul.u32.u64.compose %v661, %v656
    %v666 = vextract.low.u32 %v665
    %v667 = vextract.high.u32 %v665
    %v668 = vmul.u32 %v661, %v652
    %v669 = vadd.s32 %v664, %v666
    %vm670 = vc.u32 %v664, %v666
    %v671 = vadd.s32 %v667, 1
    %v672 = vsel %vm670, %v671, %v667
    %v673 = vadd.s32 %v668, %v672
    %v674 = vadd.s32 %v673, 536870912
    %v675 = vshrl.u32 %v674, 30
    %v676 = vshll.u32 %v675, 30
    %v677 = vsub.s32 %v673, %v676
    %vm678 = vcmp.lt.s32.totalorder %v677, 0
    %v679 = vsub.s32 0, %v677
    %v680 = vsel %vm678, %v679, %v677
    %v681 = vclz %v680
    %v682 = vsub.s32 %v681, 2
    %vm683 = vcmp.gt.s32.totalorder 0, %v682
    %v684 = vsel %vm683, 0, %v682
    %v685 = vsub.s32 32, %v684
    %v686 = vshll.u32 %v677, %v684
    %v687 = vshrl.u32 %v669, %v685
    %v688 = vor.u32 %v686, %v687
    %v689 = vsub.s32 4294967266, %v684
    %v690 = vadd.s32 %v689, 127
    %v691 = vshll.u32 %v690, 23
    %v692 = vor.u32 4788187, %v691
    %v693 = vand.u32 2147483647, %v692
    %v695 = vcvt.s32.f32 %v688
    %v696 = vmul.f32 %v695, %v693
    %v697 = vxor.u32 %v696, 2147483648
    %v698 = vsel %vm615, %v697, %v696
    %v699 = vsub.s32 4, %v675
    %v700 = vsel %vm615, %v699, %v675
    %v701 = vsel %vm614, %v193, %v698
    %v702 = vsel %vm614, 0, %v700
    %v703 = vcosq.f32.pop %v701
    %v704 = vsinq.f32.pop %v701
    %vm705 = vweird.f32 %v193
    %v706 = vadd.s32 %v702, 3
    %v707 = vand.u32 %v706, 3
    %vm708 = vcmp.lt.s32.totalorder %v707, 2
    %vm709 = vcmp.eq.s32.totalorder %v707, 0
    %v710 = vxor.u32 %v704, 2147483648
    %v711 = vsel %vm709, %v703, %v710
    %vm712 = vcmp.eq.s32.totalorder %v707, 2
    %v713 = vxor.u32 %v703, 2147483648
    %v714 = vsel %vm712, %v713, %v704
    %v715 = vsel %vm708, %v711, %v714
    %v716 = vsel %vm705, nan, %v715
    %v717 = vand.u32 2147483647, %v194
    %vm718 = vcmp.le.f32.partialorder %v717, 0.7853982
    %vm719 = vcmp.lt.s32.totalorder %v194, 0
    %v720 = vand.u32 %v194, 2139095040
    %v721 = vshrl.u32 %v720, 23
    %v722 = vsub.s32 %v721, 127
    %v723 = vand.u32 2147483647, %v194
    %v724 = vand.u32 %v723, 8388607
    %v725 = vor.u32 %v724, 8388608
    %v726 = vsub.s32 0, %v725
    %v727 = vadd.s32 %v722, 1
    %vm728 = vcmp.gt.s32.totalorder %v727, 0
    %v729 = vsel %vm728, %v727, 0
    %v730 = vshrl.u32 %v729, 5
    %v731 = vand.u32 %v729, 31
    %v732 = vsub.s32 32, %v731
    %v733 = vshrl.u32 683565275, %v732
    %v734 = vshll.u32 683565275, %v731
    %v735 = vshrl.u32 2475754826, %v732
    %v736 = vor.u32 %v734, %v735
    %v737 = vshll.u32 2475754826, %v731
    %v738 = vshrl.u32 2131351028, %v732
    %v739 = vor.u32 %v737, %v738
    %v740 = vshll.u32 2131351028, %v731
    %v741 = vshrl.u32 2102212464, %v732
    %v742 = vor.u32 %v740, %v741
    %v743 = vshll.u32 2102212464, %v731
    %v744 = vshrl.u32 920167782, %v732
    %v745 = vor.u32 %v743, %v744
    %v746 = vshll.u32 920167782, %v731
    %v747 = vshrl.u32 1326507024, %v732
    %v748 = vor.u32 %v746, %v747
    %vm749 = vcmp.lt.s32.totalorder %v730, 1
    %vm750 = vcmp.lt.s32.totalorder %v730, 2
    %vm751 = vcmp.lt.s32.totalorder %v730, 3
    %vm752 = vcmp.lt.s32.totalorder %v730, 4
    %v753 = vsel %vm749, %v733, %v736
    %v754 = vsel %vm752, %v742, 2102212464
    %v755 = vsel %vm751, %v739, %v754
    %v756 = vsel %vm750, %v753, %v755
    %v757 = vsel %vm749, %v736, %v739
    %v758 = vsel %vm752, %v745, 920167782
    %v759 = vsel %vm751, %v742, %v758
    %v760 = vsel %vm750, %v757, %v759
    %v761 = vsel %vm749, %v739, %v742
    %v762 = vsel %vm752, %v748, 1326507024
    %v763 = vsel %vm751, %v745, %v762
    %v764 = vsel %vm750, %v761, %v763
    %v765 = vshll.u32 %v725, 8
    %v766 = vmul.u32.u64.compose %v765, %v764
    %v767 = vextract.low.u32 %v766
    %v768 = vextract.high.u32 %v766
    %v769 = vmul.u32.u64.compose %v765, %v760
    %v770 = vextract.low.u32 %v769
    %v771 = vextract.high.u32 %v769
    %v772 = vmul.u32 %v765, %v756
    %v773 = vadd.s32 %v768, %v770
    %vm774 = vc.u32 %v768, %v770
    %v775 = vadd.s32 %v771, 1
    %v776 = vsel %vm774, %v775, %v771
    %v777 = vadd.s32 %v772, %v776
    %v778 = vadd.s32 %v777, 536870912
    %v779 = vshrl.u32 %v778, 30
    %v780 = vshll.u32 %v779, 30
    %v781 = vsub.s32 %v777, %v780
    %vm782 = vcmp.lt.s32.totalorder %v781, 0
    %v783 = vsub.s32 0, %v781
    %v784 = vsel %vm782, %v783, %v781
    %v785 = vclz %v784
    %v786 = vsub.s32 %v785, 2
    %vm787 = vcmp.gt.s32.totalorder 0, %v786
    %v788 = vsel %vm787, 0, %v786
    %v789 = vsub.s32 32, %v788
    %v790 = vshll.u32 %v781, %v788
    %v791 = vshrl.u32 %v773, %v789
    %v792 = vor.u32 %v790, %v791
    %v793 = vsub.s32 4294967266, %v788
    %v794 = vadd.s32 %v793, 127
    %v795 = vshll.u32 %v794, 23
    %v796 = vor.u32 4788187, %v795
    %v797 = vand.u32 2147483647, %v796
    %v799 = vcvt.s32.f32 %v792
    %v800 = vmul.f32 %v799, %v797
    %v801 = vxor.u32 %v800, 2147483648
    %v802 = vsel %vm719, %v801, %v800
    %v803 = vsub.s32 4, %v779
    %v804 = vsel %vm719, %v803, %v779
    %v805 = vsel %vm718, %v194, %v802
    %v806 = vsel %vm718, 0, %v804
    %v807 = vcosq.f32.pop %v805
    %v808 = vsinq.f32.pop %v805
    %vm809 = vweird.f32 %v194
    %v810 = vadd.s32 %v806, 3
    %v811 = vand.u32 %v810, 3
    %vm812 = vcmp.lt.s32.totalorder %v811, 2
    %vm813 = vcmp.eq.s32.totalorder %v811, 0
    %v814 = vxor.u32 %v808, 2147483648
    %v815 = vsel %vm813, %v807, %v814
    %vm816 = vcmp.eq.s32.totalorder %v811, 2
    %v817 = vxor.u32 %v807, 2147483648
    %v818 = vsel %vm816, %v817, %v808
    %v819 = vsel %vm812, %v815, %v818
    %v820 = vsel %vm809, nan, %v819
    %v821 = vand.u32 2147483647, %v195
    %vm822 = vcmp.le.f32.partialorder %v821, 0.7853982
    %vm823 = vcmp.lt.s32.totalorder %v195, 0
    %v824 = vand.u32 %v195, 2139095040
    %v825 = vshrl.u32 %v824, 23
    %v826 = vsub.s32 %v825, 127
    %v827 = vand.u32 2147483647, %v195
    %v828 = vand.u32 %v827, 8388607
    %v829 = vor.u32 %v828, 8388608
    %v830 = vsub.s32 0, %v829
    %v831 = vadd.s32 %v826, 1
    %vm832 = vcmp.gt.s32.totalorder %v831, 0
    %v833 = vsel %vm832, %v831, 0
    %v834 = vshrl.u32 %v833, 5
    %v835 = vand.u32 %v833, 31
    %v836 = vsub.s32 32, %v835
    %v837 = vshrl.u32 683565275, %v836
    %v838 = vshll.u32 683565275, %v835
    %v839 = vshrl.u32 2475754826, %v836
    %v840 = vor.u32 %v838, %v839
    %v841 = vshll.u32 2475754826, %v835
    %v842 = vshrl.u32 2131351028, %v836
    %v843 = vor.u32 %v841, %v842
    %v844 = vshll.u32 2131351028, %v835
    %v845 = vshrl.u32 2102212464, %v836
    %v846 = vor.u32 %v844, %v845
    %v847 = vshll.u32 2102212464, %v835
    %v848 = vshrl.u32 920167782, %v836
    %v849 = vor.u32 %v847, %v848
    %v850 = vshll.u32 920167782, %v835
    %v851 = vshrl.u32 1326507024, %v836
    %v852 = vor.u32 %v850, %v851
    %vm853 = vcmp.lt.s32.totalorder %v834, 1
    %vm854 = vcmp.lt.s32.totalorder %v834, 2
    %vm855 = vcmp.lt.s32.totalorder %v834, 3
    %vm856 = vcmp.lt.s32.totalorder %v834, 4
    %v857 = vsel %vm853, %v837, %v840
    %v858 = vsel %vm856, %v846, 2102212464
    %v859 = vsel %vm855, %v843, %v858
    %v860 = vsel %vm854, %v857, %v859
    %v861 = vsel %vm853, %v840, %v843
    %v862 = vsel %vm856, %v849, 920167782
    %v863 = vsel %vm855, %v846, %v862
    %v864 = vsel %vm854, %v861, %v863
    %v865 = vsel %vm853, %v843, %v846
    %v866 = vsel %vm856, %v852, 1326507024
    %v867 = vsel %vm855, %v849, %v866
    %v868 = vsel %vm854, %v865, %v867
    %v869 = vshll.u32 %v829, 8
    %v870 = vmul.u32.u64.compose %v869, %v868
    %v871 = vextract.low.u32 %v870
    %v872 = vextract.high.u32 %v870
    %v873 = vmul.u32.u64.compose %v869, %v864
    %v874 = vextract.low.u32 %v873
    %v875 = vextract.high.u32 %v873
    %v876 = vmul.u32 %v869, %v860
    %v877 = vadd.s32 %v872, %v874
    %vm878 = vc.u32 %v872, %v874
    %v879 = vadd.s32 %v875, 1
    %v880 = vsel %vm878, %v879, %v875
    %v881 = vadd.s32 %v876, %v880
    %v882 = vadd.s32 %v881, 536870912
    %v883 = vshrl.u32 %v882, 30
    %v884 = vshll.u32 %v883, 30
    %v885 = vsub.s32 %v881, %v884
    %vm886 = vcmp.lt.s32.totalorder %v885, 0
    %v887 = vsub.s32 0, %v885
    %v888 = vsel %vm886, %v887, %v885
    %v889 = vclz %v888
    %v890 = vsub.s32 %v889, 2
    %vm891 = vcmp.gt.s32.totalorder 0, %v890
    %v892 = vsel %vm891, 0, %v890
    %v893 = vsub.s32 32, %v892
    %v894 = vshll.u32 %v885, %v892
    %v895 = vshrl.u32 %v877, %v893
    %v896 = vor.u32 %v894, %v895
    %v897 = vsub.s32 4294967266, %v892
    %v898 = vadd.s32 %v897, 127
    %v899 = vshll.u32 %v898, 23
    %v900 = vor.u32 4788187, %v899
    %v901 = vand.u32 2147483647, %v900
    %v903 = vcvt.s32.f32 %v896
    %v904 = vmul.f32 %v903, %v901
    %v905 = vxor.u32 %v904, 2147483648
    %v906 = vsel %vm823, %v905, %v904
    %v907 = vsub.s32 4, %v883
    %v908 = vsel %vm823, %v907, %v883
    %v909 = vsel %vm822, %v195, %v906
    %v910 = vsel %vm822, 0, %v908
    %v911 = vcosq.f32.pop %v909
    %v912 = vsinq.f32.pop %v909
    %vm913 = vweird.f32 %v195
    %v914 = vadd.s32 %v910, 3
    %v915 = vand.u32 %v914, 3
    %vm916 = vcmp.lt.s32.totalorder %v915, 2
    %vm917 = vcmp.eq.s32.totalorder %v915, 0
    %v918 = vxor.u32 %v912, 2147483648
    %v919 = vsel %vm917, %v911, %v918
    %vm920 = vcmp.eq.s32.totalorder %v915, 2
    %v921 = vxor.u32 %v911, 2147483648
    %v922 = vsel %vm920, %v921, %v912
    %v923 = vsel %vm916, %v919, %v922
    %v924 = vsel %vm913, nan, %v923
    %v925 = vand.u32 2147483647, %v196
    %vm926 = vcmp.le.f32.partialorder %v925, 0.7853982
    %vm927 = vcmp.lt.s32.totalorder %v196, 0
    %v928 = vand.u32 %v196, 2139095040
    %v929 = vshrl.u32 %v928, 23
    %v930 = vsub.s32 %v929, 127
    %v931 = vand.u32 2147483647, %v196
    %v932 = vand.u32 %v931, 8388607
    %v933 = vor.u32 %v932, 8388608
    %v934 = vsub.s32 0, %v933
    %v935 = vadd.s32 %v930, 1
    %vm936 = vcmp.gt.s32.totalorder %v935, 0
    %v937 = vsel %vm936, %v935, 0
    %v938 = vshrl.u32 %v937, 5
    %v939 = vand.u32 %v937, 31
    %v940 = vsub.s32 32, %v939
    %v941 = vshrl.u32 683565275, %v940
    %v942 = vshll.u32 683565275, %v939
    %v943 = vshrl.u32 2475754826, %v940
    %v944 = vor.u32 %v942, %v943
    %v945 = vshll.u32 2475754826, %v939
    %v946 = vshrl.u32 2131351028, %v940
    %v947 = vor.u32 %v945, %v946
    %v948 = vshll.u32 2131351028, %v939
    %v949 = vshrl.u32 2102212464, %v940
    %v950 = vor.u32 %v948, %v949
    %v951 = vshll.u32 2102212464, %v939
    %v952 = vshrl.u32 920167782, %v940
    %v953 = vor.u32 %v951, %v952
    %v954 = vshll.u32 920167782, %v939
    %v955 = vshrl.u32 1326507024, %v940
    %v956 = vor.u32 %v954, %v955
    %vm957 = vcmp.lt.s32.totalorder %v938, 1
    %vm958 = vcmp.lt.s32.totalorder %v938, 2
    %vm959 = vcmp.lt.s32.totalorder %v938, 3
    %vm960 = vcmp.lt.s32.totalorder %v938, 4
    %v961 = vsel %vm957, %v941, %v944
    %v962 = vsel %vm960, %v950, 2102212464
    %v963 = vsel %vm959, %v947, %v962
    %v964 = vsel %vm958, %v961, %v963
    %v965 = vsel %vm957, %v944, %v947
    %v966 = vsel %vm960, %v953, 920167782
    %v967 = vsel %vm959, %v950, %v966
    %v968 = vsel %vm958, %v965, %v967
    %v969 = vsel %vm957, %v947, %v950
    %v970 = vsel %vm960, %v956, 1326507024
    %v971 = vsel %vm959, %v953, %v970
    %v972 = vsel %vm958, %v969, %v971
    %v973 = vshll.u32 %v933, 8
    %v974 = vmul.u32.u64.compose %v973, %v972
    %v975 = vextract.low.u32 %v974
    %v976 = vextract.high.u32 %v974
    %v977 = vmul.u32.u64.compose %v973, %v968
    %v978 = vextract.low.u32 %v977
    %v979 = vextract.high.u32 %v977
    %v980 = vmul.u32 %v973, %v964
    %v981 = vadd.s32 %v976, %v978
    %vm982 = vc.u32 %v976, %v978
    %v983 = vadd.s32 %v979, 1
    %v984 = vsel %vm982, %v983, %v979
    %v985 = vadd.s32 %v980, %v984
    %v986 = vadd.s32 %v985, 536870912
    %v987 = vshrl.u32 %v986, 30
    %v988 = vshll.u32 %v987, 30
    %v989 = vsub.s32 %v985, %v988
    %vm990 = vcmp.lt.s32.totalorder %v989, 0
    %v991 = vsub.s32 0, %v989
    %v992 = vsel %vm990, %v991, %v989
    %v993 = vclz %v992
    %v994 = vsub.s32 %v993, 2
    %vm995 = vcmp.gt.s32.totalorder 0, %v994
    %v996 = vsel %vm995, 0, %v994
    %v997 = vsub.s32 32, %v996
    %v998 = vshll.u32 %v989, %v996
    %v999 = vshrl.u32 %v981, %v997
    %v1000 = vor.u32 %v998, %v999
    %v1001 = vsub.s32 4294967266, %v996
    %v1002 = vadd.s32 %v1001, 127
    %v1003 = vshll.u32 %v1002, 23
    %v1004 = vor.u32 4788187, %v1003
    %v1005 = vand.u32 2147483647, %v1004
    %v1007 = vcvt.s32.f32 %v1000
    %v1008 = vmul.f32 %v1007, %v1005
    %v1009 = vxor.u32 %v1008, 2147483648
    %v1010 = vsel %vm927, %v1009, %v1008
    %v1011 = vsub.s32 4, %v987
    %v1012 = vsel %vm927, %v1011, %v987
    %v1013 = vsel %vm926, %v196, %v1010
    %v1014 = vsel %vm926, 0, %v1012
    %v1015 = vcosq.f32.pop %v1013
    %v1016 = vsinq.f32.pop %v1013
    %vm1017 = vweird.f32 %v196
    %v1018 = vadd.s32 %v1014, 3
    %v1019 = vand.u32 %v1018, 3
    %vm1020 = vcmp.lt.s32.totalorder %v1019, 2
    %vm1021 = vcmp.eq.s32.totalorder %v1019, 0
    %v1022 = vxor.u32 %v1016, 2147483648
    %v1023 = vsel %vm1021, %v1015, %v1022
    %vm1024 = vcmp.eq.s32.totalorder %v1019, 2
    %v1025 = vxor.u32 %v1015, 2147483648
    %v1026 = vsel %vm1024, %v1025, %v1016
    %v1027 = vsel %vm1020, %v1023, %v1026
    %v1028 = vsel %vm1017, nan, %v1027
    %v1029 = vmul.f32 %v171, %v716
    %v1030 = vmul.f32 %v178, %v820
    %v1031 = vmul.f32 %v185, %v924
    %v1032 = vmul.f32 %v192, %v1028
    %v1033 = vld [vmem:[#allocation4] sm:$0xff]
    %v1034 = vld [vmem:[#allocation4 + $0x8] sm:$0xff]
    %v1035 = vmul.f32 %v1033, 2.0
    %v1036 = vmul.f32 %v1034, 2.0
    %v1037 = vmul.f32 %v609, 0.02
    %v1038 = vmul.f32 %v610, 0.02
    %v1039 = vmul.f32 %v611, 0.02
    %v1040 = vmul.f32 %v612, 0.02
    %v1041 = vmul.f32 %v1029, 0.02
    %v1042 = vmul.f32 %v1030, 0.02
    %v1043 = vmul.f32 %v1031, 0.02
    %v1044 = vmul.f32 %v1032, 0.02
    %v1053 = vcombine.low %v1037, %v1038
    %v1054 = vcombine.low %v1039, %v1040
    %v1056 = vunpack.c.l.s4 1983009808
    %v1057 = vunpack.c.0.s8 %v1056
    %v1058 = vlaneseq
    %v1059 = vshrl.u32 %v1058, 7
    %v1060 = vsub.s32 %v1057, %v1059
    %v1061 = vrot.slane %v1053, %v1060
    %v1063 = vunpack.c.l.s4 1983009808
    %v1064 = vunpack.c.0.s8 %v1063
    %v1065 = vlaneseq
    %v1066 = vshrl.u32 %v1065, 7
    %v1067 = vsub.s32 %v1064, %v1066
    %v1068 = vrot.slane %v1054, %v1067
    %v1069 = vcombine.low %v1061, %v1068
    %v1070 = vcombine.low %v1041, %v1042
    %v1071 = vcombine.low %v1043, %v1044
    %v1073 = vunpack.c.l.s4 1983009808
    %v1074 = vunpack.c.0.s8 %v1073
    %v1075 = vlaneseq
    %v1076 = vshrl.u32 %v1075, 7
    %v1077 = vsub.s32 %v1074, %v1076
    %v1078 = vrot.slane %v1070, %v1077
    %v1080 = vunpack.c.l.s4 1983009808
    %v1081 = vunpack.c.0.s8 %v1080
    %v1082 = vlaneseq
    %v1083 = vshrl.u32 %v1082, 7
    %v1084 = vsub.s32 %v1081, %v1083
    %v1085 = vrot.slane %v1071, %v1084
    %v1086 = vcombine.low %v1078, %v1085
    %v1089 = vadd.f32 %v1035, %v1069
    %v1090 = vadd.f32 %v1036, %v1086
    %v1091 = vadd.s32 %v28, 512
    %v1092 = vadd.s32 %v28, 640
    %v1093 = vadd.s32 %v28, 768
    %v1094 = vadd.s32 %v28, 896
    %s1095 = smul.u32 0, 2048
    %s1096 = sadd.s32 %s24, %s1095
    %v1097 = vmul.u32 %v26, 1024
    %v1098 = vstv %s1096
    %v1099 = vadd.s32 %v1098, %v1097
    %v1100 = vadd.s32 %v1099, %v28
    %v1101 = vadd.s32 %v1099, %v29
    %v1102 = vadd.s32 %v1099, %v30
    %v1103 = vadd.s32 %v1099, %v31
    %v1104 = vadd.s32 %v1099, %v1091
    %v1105 = vadd.s32 %v1099, %v1092
    %v1106 = vadd.s32 %v1099, %v1093
    %v1107 = vadd.s32 %v1099, %v1094
    %v1108 = vmul.u32 %v1100, 2654435769
    %v1109 = vmul.u32 %v1101, 2654435769
    %v1110 = vmul.u32 %v1102, 2654435769
    %v1111 = vmul.u32 %v1103, 2654435769
    %v1112 = vmul.u32 %v1104, 2654435769
    %v1113 = vmul.u32 %v1105, 2654435769
    %v1114 = vmul.u32 %v1106, 2654435769
    %v1115 = vmul.u32 %v1107, 2654435769
    %v1116 = vadd.s32 %v1108, 1803155617
    %v1117 = vadd.s32 %v1109, 1803155617
    %v1118 = vadd.s32 %v1110, 1803155617
    %v1119 = vadd.s32 %v1111, 1803155617
    %v1120 = vadd.s32 %v1112, 1803155617
    %v1121 = vadd.s32 %v1113, 1803155617
    %v1122 = vadd.s32 %v1114, 1803155617
    %v1123 = vadd.s32 %v1115, 1803155617
    %v1124 = vshrl.u32 %v1116, 16
    %v1125 = vshrl.u32 %v1117, 16
    %v1126 = vshrl.u32 %v1118, 16
    %v1127 = vshrl.u32 %v1119, 16
    %v1128 = vshrl.u32 %v1120, 16
    %v1129 = vshrl.u32 %v1121, 16
    %v1130 = vshrl.u32 %v1122, 16
    %v1131 = vshrl.u32 %v1123, 16
    %v1132 = vxor.u32 %v1116, %v1124
    %v1133 = vxor.u32 %v1117, %v1125
    %v1134 = vxor.u32 %v1118, %v1126
    %v1135 = vxor.u32 %v1119, %v1127
    %v1136 = vxor.u32 %v1120, %v1128
    %v1137 = vxor.u32 %v1121, %v1129
    %v1138 = vxor.u32 %v1122, %v1130
    %v1139 = vxor.u32 %v1123, %v1131
    %v1140 = vmul.u32 %v1132, 2246822507
    %v1141 = vmul.u32 %v1133, 2246822507
    %v1142 = vmul.u32 %v1134, 2246822507
    %v1143 = vmul.u32 %v1135, 2246822507
    %v1144 = vmul.u32 %v1136, 2246822507
    %v1145 = vmul.u32 %v1137, 2246822507
    %v1146 = vmul.u32 %v1138, 2246822507
    %v1147 = vmul.u32 %v1139, 2246822507
    %v1148 = vshrl.u32 %v1140, 13
    %v1149 = vshrl.u32 %v1141, 13
    %v1150 = vshrl.u32 %v1142, 13
    %v1151 = vshrl.u32 %v1143, 13
    %v1152 = vshrl.u32 %v1144, 13
    %v1153 = vshrl.u32 %v1145, 13
    %v1154 = vshrl.u32 %v1146, 13
    %v1155 = vshrl.u32 %v1147, 13
    %v1156 = vxor.u32 %v1140, %v1148
    %v1157 = vxor.u32 %v1141, %v1149
    %v1158 = vxor.u32 %v1142, %v1150
    %v1159 = vxor.u32 %v1143, %v1151
    %v1160 = vxor.u32 %v1144, %v1152
    %v1161 = vxor.u32 %v1145, %v1153
    %v1162 = vxor.u32 %v1146, %v1154
    %v1163 = vxor.u32 %v1147, %v1155
    %v1164 = vmul.u32 %v1156, 3266489909
    %v1165 = vmul.u32 %v1157, 3266489909
    %v1166 = vmul.u32 %v1158, 3266489909
    %v1167 = vmul.u32 %v1159, 3266489909
    %v1168 = vmul.u32 %v1160, 3266489909
    %v1169 = vmul.u32 %v1161, 3266489909
    %v1170 = vmul.u32 %v1162, 3266489909
    %v1171 = vmul.u32 %v1163, 3266489909
    %v1172 = vshrl.u32 %v1164, 16
    %v1173 = vshrl.u32 %v1165, 16
    %v1174 = vshrl.u32 %v1166, 16
    %v1175 = vshrl.u32 %v1167, 16
    %v1176 = vshrl.u32 %v1168, 16
    %v1177 = vshrl.u32 %v1169, 16
    %v1178 = vshrl.u32 %v1170, 16
    %v1179 = vshrl.u32 %v1171, 16
    %v1180 = vxor.u32 %v1164, %v1172
    %v1181 = vxor.u32 %v1165, %v1173
    %v1182 = vxor.u32 %v1166, %v1174
    %v1183 = vxor.u32 %v1167, %v1175
    %v1184 = vxor.u32 %v1168, %v1176
    %v1185 = vxor.u32 %v1169, %v1177
    %v1186 = vxor.u32 %v1170, %v1178
    %v1187 = vxor.u32 %v1171, %v1179
    %v1188 = vshrl.u32 %v1180, 1
    %v1189 = vshrl.u32 %v1181, 1
    %v1190 = vshrl.u32 %v1182, 1
    %v1191 = vshrl.u32 %v1183, 1
    %v1192 = vshrl.u32 %v1184, 1
    %v1193 = vshrl.u32 %v1185, 1
    %v1194 = vshrl.u32 %v1186, 1
    %v1195 = vshrl.u32 %v1187, 1
    %vm1196 = vcmp.lt.u32.totalorder %v1188, 1073741824
    %vm1197 = vcmp.lt.u32.totalorder %v1189, 1073741824
    %vm1198 = vcmp.lt.u32.totalorder %v1190, 1073741824
    %vm1199 = vcmp.lt.u32.totalorder %v1191, 1073741824
    %vm1200 = vcmp.lt.u32.totalorder %v1192, 1073741824
    %vm1201 = vcmp.lt.u32.totalorder %v1193, 1073741824
    %vm1202 = vcmp.lt.u32.totalorder %v1194, 1073741824
    %vm1203 = vcmp.lt.u32.totalorder %v1195, 1073741824
    %v1206 = vcombine.high %v1089, %v1089
    %v1208 = vunpack.c.l.s4 1983009808
    %v1209 = vunpack.c.0.s8 %v1208
    %v1210 = vlaneseq
    %v1211 = vshrl.u32 %v1210, 7
    %v1212 = vsub.s32 %v1209, %v1211
    %v1213 = vrot.slane %v1089, %v1212
    %v1215 = vunpack.c.l.s4 1983009808
    %v1216 = vunpack.c.0.s8 %v1215
    %v1217 = vlaneseq
    %v1218 = vshrl.u32 %v1217, 7
    %v1219 = vsub.s32 %v1216, %v1218
    %v1220 = vrot.slane %v1206, %v1219
    %v1221 = vcombine.high %v1213, %v1213
    %v1222 = vcombine.high %v1220, %v1220
    %v1223 = vcombine.high %v1090, %v1090
    %v1225 = vunpack.c.l.s4 1983009808
    %v1226 = vunpack.c.0.s8 %v1225
    %v1227 = vlaneseq
    %v1228 = vshrl.u32 %v1227, 7
    %v1229 = vsub.s32 %v1226, %v1228
    %v1230 = vrot.slane %v1090, %v1229
    %v1232 = vunpack.c.l.s4 1983009808
    %v1233 = vunpack.c.0.s8 %v1232
    %v1234 = vlaneseq
    %v1235 = vshrl.u32 %v1234, 7
    %v1236 = vsub.s32 %v1233, %v1235
    %v1237 = vrot.slane %v1223, %v1236
    %v1238 = vcombine.high %v1230, %v1230
    %v1239 = vcombine.high %v1237, %v1237
    %v1248 = vsel %vm1196, %v1213, 0.0
    %v1249 = vsel %vm1197, %v1221, 0.0
    %v1250 = vsel %vm1198, %v1220, 0.0
    %v1251 = vsel %vm1199, %v1222, 0.0
    %v1252 = vsel %vm1200, %v1230, 0.0
    %v1253 = vsel %vm1201, %v1238, 0.0
    %v1254 = vsel %vm1202, %v1237, 0.0
    %v1255 = vsel %vm1203, %v1239, 0.0
    %v1264 = vcombine.low %v1248, %v1249
    %v1265 = vcombine.low %v1250, %v1251
    %v1267 = vunpack.c.l.s4 1983009808
    %v1268 = vunpack.c.0.s8 %v1267
    %v1269 = vlaneseq
    %v1270 = vshrl.u32 %v1269, 7
    %v1271 = vsub.s32 %v1268, %v1270
    %v1272 = vrot.slane %v1264, %v1271
    %v1274 = vunpack.c.l.s4 1983009808
    %v1275 = vunpack.c.0.s8 %v1274
    %v1276 = vlaneseq
    %v1277 = vshrl.u32 %v1276, 7
    %v1278 = vsub.s32 %v1275, %v1277
    %v1279 = vrot.slane %v1265, %v1278
    %v1280 = vcombine.low %v1272, %v1279
    %v1281 = vcombine.low %v1252, %v1253
    %v1282 = vcombine.low %v1254, %v1255
    %v1284 = vunpack.c.l.s4 1983009808
    %v1285 = vunpack.c.0.s8 %v1284
    %v1286 = vlaneseq
    %v1287 = vshrl.u32 %v1286, 7
    %v1288 = vsub.s32 %v1285, %v1287
    %v1289 = vrot.slane %v1281, %v1288
    %v1291 = vunpack.c.l.s4 1983009808
    %v1292 = vunpack.c.0.s8 %v1291
    %v1293 = vlaneseq
    %v1294 = vshrl.u32 %v1293, 7
    %v1295 = vsub.s32 %v1292, %v1294
    %v1296 = vrot.slane %v1282, %v1295
    %v1297 = vcombine.low %v1289, %v1296
    %1300 = vst [vmem:[#allocation7] sm:$0xff] %v1280
    %1301 = vst [vmem:[#allocation7 + $0x8] sm:$0xff] %v1297
    // Predicated region
    $region10: #{tpu_custom_call.1} parent=1 // pred_check
      _
    $region11: #{tpu_custom_call.1} parent=1 // pred_check_branch
      %1303 = sbr.rel (0) target = $region13
    $region12: #{tpu_custom_call.1} parent=1 // pred_region
      %s1305 = ssub.s32 256, 256
      %1306 = vsyncadd [#allocation6], %s1305
      %s1308 = sshll.u32 [#allocation7], 4
      %s1309 = int_to_ptr.vmem [resolvable:$true] %s1308
      %1311 = dma.vmem_to_hbm [thread:$0]  %s1309, 256, %s2, [#allocation6]
    $region13: #{tpu_custom_call.1} parent=1 // pred_fallthru
      _
    // Predicated region
    $region14: #{tpu_custom_call.1} parent=1 // pred_check
      _
    $region15: #{tpu_custom_call.1} parent=1 // pred_check_branch
      %1313 = sbr.rel (0) target = $region17
    $region16: #{tpu_custom_call.1} parent=1 // pred_region
      %1314 = dma.done [#allocation6], 256
    $region17: #{tpu_custom_call.1} parent=1 // pred_fallthru
      _
    %1315 = vsyncpa [#allocation5], 1
    %1316 = vsyncpa [#allocation6], 1

</llo_original>
